<compile_context>
chip_gen: v5e
topology: v5e:2x2
jax: 0.10.0
libtpu: 0.0.40
codegen_flags: <defaults>
</compile_context>

<pallas_src>
import functools

import jax
import jax.numpy as jnp
from jax.experimental import pallas as pl
from jax.experimental.pallas import tpu as pltpu

HIDDEN = 128
LANES = 128


def _round_up(x, m):
    return ((x + m - 1) // m) * m


def _actor_critic_kernel(x_ref,
                         w1_ref, b1_ref,
                         w2_ref, b2_ref,
                         wh_ref, bh_ref,
                         heads_ref, probs_ref,
                         *, action_dim):
    x = x_ref[...]                                                    # (TB, S_pad)

    # shared body: Linear -> ReLU -> Linear -> ReLU   (MXU + VPU)
    h1 = jnp.dot(x, w1_ref[...], preferred_element_type=jnp.float32) + b1_ref[...]
    h1 = jnp.maximum(h1, 0.0)
    h2 = jnp.dot(h1, w2_ref[...], preferred_element_type=jnp.float32) + b2_ref[...]
    h2 = jnp.maximum(h2, 0.0)

    # fused heads: lanes [0, A) = policy logits, lane A = state value, rest 0.
    heads = jnp.dot(h2, wh_ref[...], preferred_element_type=jnp.float32) + bh_ref[...]
    heads_ref[...] = heads                                            # lane-dense store

    # masked, max-stabilized softmax over the logit lanes only.
    lane = jax.lax.broadcasted_iota(jnp.int32, heads.shape, 1)
    valid = lane < action_dim
    masked = jnp.where(valid, heads, jnp.float32(-1e30))
    m = jnp.max(masked, axis=-1, keepdims=True)
    e = jnp.exp(masked - m)                                           # masked lanes -> 0
    denom = jnp.sum(e, axis=-1, keepdims=True)
    probs_ref[...] = e * pl.reciprocal(denom, approx=True)            # EUP vrcp


def actor_critic_forward(state, params):
    """Fused ActorCritic forward.

    Returns (action_logits, action_probs, state_value): logits/probs are the
    Categorical distribution parameters; state_value matches value_head.
    """
    B, S = state.shape
    A = params["wp"].shape[1]
    assert A + 1 <= LANES, "action_dim + value column must fit in 128 lanes"

    f32 = jnp.float32

    # --- lane-dense layout prep (free wrapper-side plumbing) -----------------
    S_pad = _round_up(S, LANES)
    # batch tile: multiple of 8 sublanes; 256 rows fills the v6e/v7x MXU M dim.
    TB = 256 if B >= 256 else _round_up(B, 8)
    B_pad = _round_up(B, TB)

    x_pad = jnp.zeros((B_pad, S_pad), f32).at[:B, :S].set(state.astype(f32))
    w1_pad = jnp.zeros((S_pad, HIDDEN), f32).at[:S, :].set(params["w1"])
    b1 = params["b1"].reshape(1, HIDDEN).astype(f32)
    w2 = params["w2"].astype(f32)
    b2 = params["b2"].reshape(1, HIDDEN).astype(f32)

    # fused head weights: cols [0, A) = policy, col A = value, rest zero.
    wh = (jnp.zeros((HIDDEN, LANES), f32)
          .at[:, :A].set(params["wp"])
          .at[:, A:A + 1].set(params["wv"]))
    bh = (jnp.zeros((1, LANES), f32)
          .at[:, :A].set(params["bp"].reshape(1, A))
          .at[:, A:A + 1].set(params["bv"].reshape(1, 1)))

    # --- pallas_call ----------------------------------------------------------
    grid = (B_pad // TB,)
    x_spec = pl.BlockSpec((TB, S_pad), lambda i: (i, 0))
    out_spec = pl.BlockSpec((TB, LANES), lambda i: (i, 0))

    def resident(shape):  # constant index_map -> weight stays VMEM-resident
        return pl.BlockSpec(shape, lambda i: (0, 0))

    cost = pl.CostEstimate(
        flops=2 * B_pad * (S_pad * HIDDEN + HIDDEN * HIDDEN + HIDDEN * LANES),
        transcendentals=B_pad * (LANES + 1),
        bytes_accessed=4 * (B_pad * S_pad + 2 * B_pad * LANES
                            + S_pad * HIDDEN + HIDDEN * HIDDEN + HIDDEN * LANES
                            + 3 * LANES),
    )

    heads_slab, probs_slab = pl.pallas_call(
        functools.partial(_actor_critic_kernel, action_dim=A),
        out_shape=(jax.ShapeDtypeStruct((B_pad, LANES), f32),
                   jax.ShapeDtypeStruct((B_pad, LANES), f32)),
        grid=grid,
        in_specs=[x_spec,
                  resident((S_pad, HIDDEN)), resident((1, HIDDEN)),
                  resident((HIDDEN, HIDDEN)), resident((1, HIDDEN)),
                  resident((HIDDEN, LANES)), resident((1, LANES))],
        out_specs=(out_spec, out_spec),
        compiler_params=pltpu.CompilerParams(
            dimension_semantics=("parallel",)),
        cost_estimate=cost,
    )(x_pad, w1_pad, b1, w2, b2, wh, bh)

    logits = heads_slab[:B, :A]
    value = heads_slab[:B, A:A + 1]
    probs = probs_slab[:B, :A]
    return logits, probs, value


def init_params(key, state_dim, action_dim):
    """Deterministic PyTorch-Linear-style init (uniform(-1/sqrt(fan_in), +))."""
    def linear(k, fan_in, fan_out):
        kw, kb = jax.random.split(k)
        bound = 1.0 / jnp.sqrt(fan_in)
        w = jax.random.uniform(kw, (fan_in, fan_out), jnp.float32, -bound, bound)
        b = jax.random.uniform(kb, (1, fan_out), jnp.float32, -bound, bound)
        return w, b

    k1, k2, k3, k4 = jax.random.split(key, 4)
    w1, b1 = linear(k1, state_dim, HIDDEN)
    w2, b2 = linear(k2, HIDDEN, HIDDEN)
    wp, bp = linear(k3, HIDDEN, action_dim)
    wv, bv = linear(k4, HIDDEN, 1)
    return dict(w1=w1, b1=b1, w2=w2, b2=b2, wp=wp, bp=bp, wv=wv, bv=bv)


def _reference_forward(state, p):
    h1 = jnp.maximum(state @ p["w1"] + p["b1"], 0.0)
    h2 = jnp.maximum(h1 @ p["w2"] + p["b2"], 0.0)
    logits = h2 @ p["wp"] + p["bp"]
    probs = jax.nn.softmax(logits, axis=-1)
    value = h2 @ p["wv"] + p["bv"]
    return logits, probs, value


def _check(state, params, atol_probs=5e-3, rtol_probs=2e-2):
    logits, probs, value = actor_critic_forward(state, params)
    jax.block_until_ready((logits, probs, value))
    ref_logits, ref_probs, ref_value = _reference_forward(state, params)
    B = state.shape[0]
    A = params["wp"].shape[1]
    assert logits.shape == (B, A)
    assert probs.shape == (B, A)
    assert value.shape == (B, 1)
    assert jnp.allclose(logits, ref_logits, atol=1e-4, rtol=1e-4)
    assert jnp.allclose(value, ref_value, atol=1e-4, rtol=1e-4)
    # approx reciprocal in the softmax -> slightly looser tolerance on probs.
    assert jnp.allclose(probs, ref_probs, atol=atol_probs, rtol=rtol_probs)


if __name__ == "__main__":
    key = jax.random.PRNGKey(0)
    k_params, k_state, k_state2 = jax.random.split(key, 3)

    state_dim, action_dim = 16, 4
    params = init_params(k_params, state_dim, action_dim)

    # small batch (single grid step)
    state_small = jax.random.normal(k_state, (8, state_dim), jnp.float32)
    _check(state_small, params)

    # larger batch exercising the batch grid (TB=256, padded, 3 grid steps)
    state_big = jax.random.normal(k_state2, (600, state_dim), jnp.float32)
    _check(state_big, params)

    # TODO(synk): Categorical sampling/log_prob is a host-side distribution
    # object in PyTorch; the kernel returns its parameters (logits + probs).
    print("KERNEL_OK")
</pallas_src>

<mosaic_0001>
module attributes {stable_mosaic.version = 11 : i64} {
  func.func @_actor_critic_kernel(%arg0: i32, %arg1: memref<8x128xf32, #tpu.memory_space<vmem>>, %arg2: memref<128x128xf32, #tpu.memory_space<vmem>>, %arg3: memref<1x128xf32, #tpu.memory_space<vmem>>, %arg4: memref<128x128xf32, #tpu.memory_space<vmem>>, %arg5: memref<1x128xf32, #tpu.memory_space<vmem>>, %arg6: memref<128x128xf32, #tpu.memory_space<vmem>>, %arg7: memref<1x128xf32, #tpu.memory_space<vmem>>, %arg8: memref<8x128xf32, #tpu.memory_space<vmem>>, %arg9: memref<8x128xf32, #tpu.memory_space<vmem>>) attributes {dimension_semantics = [#tpu.dimension_semantics<parallel>], iteration_bounds = array<i64: 1>, scalar_prefetch = 0 : i64, scratch_operands = 0 : i64, tpu.core_type = #tpu.core_type<tc>, window_params = [{transform_indices = @transform_0, window_bounds = array<i64: 8, 128>}, {pipeline_mode = #tpu.pipeline_mode<synchronous>, transform_indices = @transform_1, window_bounds = array<i64: 128, 128>}, {pipeline_mode = #tpu.pipeline_mode<synchronous>, transform_indices = @transform_2, window_bounds = array<i64: 1, 128>}, {pipeline_mode = #tpu.pipeline_mode<synchronous>, transform_indices = @transform_3, window_bounds = array<i64: 128, 128>}, {pipeline_mode = #tpu.pipeline_mode<synchronous>, transform_indices = @transform_4, window_bounds = array<i64: 1, 128>}, {pipeline_mode = #tpu.pipeline_mode<synchronous>, transform_indices = @transform_5, window_bounds = array<i64: 128, 128>}, {pipeline_mode = #tpu.pipeline_mode<synchronous>, transform_indices = @transform_6, window_bounds = array<i64: 1, 128>}, {transform_indices = @transform_7, window_bounds = array<i64: 8, 128>}, {transform_indices = @transform_8, window_bounds = array<i64: 8, 128>}]} {
    %c0 = arith.constant 0 : index
    %c0_0 = arith.constant 0 : index
    %0 = vector.load %arg1[%c0, %c0_0] : memref<8x128xf32, #tpu.memory_space<vmem>>, vector<8x128xf32>
    %c0_1 = arith.constant 0 : index
    %c0_2 = arith.constant 0 : index
    %1 = vector.load %arg2[%c0_1, %c0_2] : memref<128x128xf32, #tpu.memory_space<vmem>>, vector<128x128xf32>
    %cst = arith.constant dense<0.000000e+00> : vector<8x128xf32>
    %2 = tpu.matmul %0, %1, %cst {dimension_numbers = #tpu.dot_dimension_numbers<[1], [0], [0], [1], [0, 0, 1, 1], [], []>} : vector<8x128xf32>, vector<128x128xf32>, vector<8x128xf32> -> vector<8x128xf32>
    %c0_3 = arith.constant 0 : index
    %c0_4 = arith.constant 0 : index
    %3 = vector.load %arg3[%c0_3, %c0_4] : memref<1x128xf32, #tpu.memory_space<vmem>>, vector<1x128xf32>
    %4 = vector.broadcast %3 : vector<1x128xf32> to vector<8x128xf32>
    %5 = arith.addf %2, %4 : vector<8x128xf32>
    %cst_5 = arith.constant 0.000000e+00 : f32
    %6 = vector.broadcast %cst_5 : f32 to vector<8x128xf32>
    %7 = arith.maximumf %5, %6 : vector<8x128xf32>
    %c0_6 = arith.constant 0 : index
    %c0_7 = arith.constant 0 : index
    %8 = vector.load %arg4[%c0_6, %c0_7] : memref<128x128xf32, #tpu.memory_space<vmem>>, vector<128x128xf32>
    %cst_8 = arith.constant dense<0.000000e+00> : vector<8x128xf32>
    %9 = tpu.matmul %7, %8, %cst_8 {dimension_numbers = #tpu.dot_dimension_numbers<[1], [0], [0], [1], [0, 0, 1, 1], [], []>} : vector<8x128xf32>, vector<128x128xf32>, vector<8x128xf32> -> vector<8x128xf32>
    %c0_9 = arith.constant 0 : index
    %c0_10 = arith.constant 0 : index
    %10 = vector.load %arg5[%c0_9, %c0_10] : memref<1x128xf32, #tpu.memory_space<vmem>>, vector<1x128xf32>
    %11 = vector.broadcast %10 : vector<1x128xf32> to vector<8x128xf32>
    %12 = arith.addf %9, %11 : vector<8x128xf32>
    %cst_11 = arith.constant 0.000000e+00 : f32
    %13 = vector.broadcast %cst_11 : f32 to vector<8x128xf32>
    %14 = arith.maximumf %12, %13 : vector<8x128xf32>
    %c0_12 = arith.constant 0 : index
    %c0_13 = arith.constant 0 : index
    %15 = vector.load %arg6[%c0_12, %c0_13] : memref<128x128xf32, #tpu.memory_space<vmem>>, vector<128x128xf32>
    %cst_14 = arith.constant dense<0.000000e+00> : vector<8x128xf32>
    %16 = tpu.matmul %14, %15, %cst_14 {dimension_numbers = #tpu.dot_dimension_numbers<[1], [0], [0], [1], [0, 0, 1, 1], [], []>} : vector<8x128xf32>, vector<128x128xf32>, vector<8x128xf32> -> vector<8x128xf32>
    %c0_15 = arith.constant 0 : index
    %c0_16 = arith.constant 0 : index
    %17 = vector.load %arg7[%c0_15, %c0_16] : memref<1x128xf32, #tpu.memory_space<vmem>>, vector<1x128xf32>
    %18 = vector.broadcast %17 : vector<1x128xf32> to vector<8x128xf32>
    %19 = arith.addf %16, %18 : vector<8x128xf32>
    %c0_17 = arith.constant 0 : index
    %c0_18 = arith.constant 0 : index
    %20 = vector.load %arg8[%c0_17, %c0_18] : memref<8x128xf32, #tpu.memory_space<vmem>>, vector<8x128xf32>
    tpu.vector_store %arg8[%c0_17, %c0_18], %19 {strides = array<i32>} : memref<8x128xf32, #tpu.memory_space<vmem>>, vector<8x128xf32>,
    %21 = tpu.iota {dimensions = array<i32: 1>} : vector<8x128xi32>
    %c4_i32 = arith.constant 4 : i32
    %22 = vector.broadcast %c4_i32 : i32 to vector<8x128xi32>
    %23 = arith.cmpi slt, %21, %22 : vector<8x128xi32>
    %cst_19 = arith.constant -1.000000e+30 : f32
    %24 = vector.broadcast %cst_19 : f32 to vector<8x128xf32>
    %25 = arith.select %23, %19, %24 : vector<8x128xi1>, vector<8x128xf32>
    %cst_20 = arith.constant dense<0xFF800000> : vector<8xf32>
    %26 = vector.multi_reduction <maximumf>, %25, %cst_20 [1] : vector<8x128xf32> to vector<8xf32>
    %27 = vector.shape_cast %26 : vector<8xf32> to vector<8x1xf32>
    %28 = vector.broadcast %27 : vector<8x1xf32> to vector<8x128xf32>
    %29 = arith.subf %25, %28 : vector<8x128xf32>
    %30 = math.exp %29 : vector<8x128xf32>
    %cst_21 = arith.constant dense<0.000000e+00> : vector<8xf32>
    %31 = vector.multi_reduction <add>, %30, %cst_21 [1] : vector<8x128xf32> to vector<8xf32>
    %32 = vector.shape_cast %31 : vector<8xf32> to vector<8x1xf32>
    %33 = tpu.reciprocal %32 {approx = true} : vector<8x1xf32> -> vector<8x1xf32>
    %34 = vector.broadcast %33 : vector<8x1xf32> to vector<8x128xf32>
    %35 = arith.mulf %30, %34 : vector<8x128xf32>
    %c0_22 = arith.constant 0 : index
    %c0_23 = arith.constant 0 : index
    %36 = vector.load %arg9[%c0_22, %c0_23] : memref<8x128xf32, #tpu.memory_space<vmem>>, vector<8x128xf32>
    tpu.vector_store %arg9[%c0_22, %c0_23], %35 {strides = array<i32>} : memref<8x128xf32, #tpu.memory_space<vmem>>, vector<8x128xf32>,
    return
  }
  func.func @transform_0(%arg0: i32) -> (i32, i32) {
    %c0_i32 = arith.constant 0 : i32
    %c0_i32_0 = arith.constant 0 : i32
    return %arg0, %c0_i32 : i32, i32
  }
  func.func @transform_1(%arg0: i32) -> (i32, i32) {
    %c0_i32 = arith.constant 0 : i32
    %c0_i32_0 = arith.constant 0 : i32
    %c0_i32_1 = arith.constant 0 : i32
    return %c0_i32, %c0_i32_0 : i32, i32
  }
  func.func @transform_2(%arg0: i32) -> (i32, i32) {
    %c0_i32 = arith.constant 0 : i32
    %c0_i32_0 = arith.constant 0 : i32
    %c0_i32_1 = arith.constant 0 : i32
    return %c0_i32, %c0_i32_0 : i32, i32
  }
  func.func @transform_3(%arg0: i32) -> (i32, i32) {
    %c0_i32 = arith.constant 0 : i32
    %c0_i32_0 = arith.constant 0 : i32
    %c0_i32_1 = arith.constant 0 : i32
    return %c0_i32, %c0_i32_0 : i32, i32
  }
  func.func @transform_4(%arg0: i32) -> (i32, i32) {
    %c0_i32 = arith.constant 0 : i32
    %c0_i32_0 = arith.constant 0 : i32
    %c0_i32_1 = arith.constant 0 : i32
    return %c0_i32, %c0_i32_0 : i32, i32
  }
  func.func @transform_5(%arg0: i32) -> (i32, i32) {
    %c0_i32 = arith.constant 0 : i32
    %c0_i32_0 = arith.constant 0 : i32
    %c0_i32_1 = arith.constant 0 : i32
    return %c0_i32, %c0_i32_0 : i32, i32
  }
  func.func @transform_6(%arg0: i32) -> (i32, i32) {
    %c0_i32 = arith.constant 0 : i32
    %c0_i32_0 = arith.constant 0 : i32
    %c0_i32_1 = arith.constant 0 : i32
    return %c0_i32, %c0_i32_0 : i32, i32
  }
  func.func @transform_7(%arg0: i32) -> (i32, i32) {
    %c0_i32 = arith.constant 0 : i32
    %c0_i32_0 = arith.constant 0 : i32
    return %arg0, %c0_i32 : i32, i32
  }
  func.func @transform_8(%arg0: i32) -> (i32, i32) {
    %c0_i32 = arith.constant 0 : i32
    %c0_i32_0 = arith.constant 0 : i32
    return %arg0, %c0_i32 : i32, i32
  }
}

</mosaic_0001>

<llo_original>
// kernel: tpu_custom_call.1
$region0: #{tpu_custom_call.1}
  #allocation0 [shape = 'u32[]', space=smem, size = 0x4, offset = 0x4, fixed_abs, tag = 'smem constant byte address 0x4 - core index']
  #allocation1 [shape = 'u32[72,128]{1,0:T(1,128)}', space=vmem, size = 0x9000, scoped, tag = 'internal scratch']
  %s0 = inlined_call_operand.hbm [shape: f32[8,128], index: 0, kind: input, shape index: {}]
  %s1 = inlined_call_operand.hbm [shape: f32[128,128], index: 1, kind: input, shape index: {}]
  %s2 = inlined_call_operand.vmem [shape: f32[1,128], index: 2, kind: input, shape index: {}]
  %s3 = inlined_call_operand.hbm [shape: f32[128,128], index: 3, kind: input, shape index: {}]
  %s4 = inlined_call_operand.vmem [shape: f32[1,128], index: 4, kind: input, shape index: {}]
  %s5 = inlined_call_operand.hbm [shape: f32[128,128], index: 5, kind: input, shape index: {}]
  %s6 = inlined_call_operand.vmem [shape: f32[1,128], index: 6, kind: input, shape index: {}]
  %s7 = inlined_call_operand.hbm [shape: f32[8,128], index: 7, kind: output, shape index: {0}]
  %s8 = inlined_call_operand.hbm [shape: f32[8,128], index: 8, kind: output, shape index: {1}]
  %9 = xla_tuple %s7, %s8
  %s10 = sld [smem:[#allocation0]]
  $region62: #{tpu_custom_call.1} parent=0
    _
  %s12 = ssub.s32 1, %s10
  %s13 = scalar_select 0, %s12, %s10
  $region1: #{tpu_custom_call.1} parent=0
    #allocation2 [shape = 'u8[4096]{0}', space=vmem, size = 0x1000, scoped, tag = 'input window, operand 0, single buffered']
    #allocation3 [shape = 's32[1]{0}', space=sflag, size = 0x4, scoped, tag = 'scoped memory for tpu_custom_call.1']
    #allocation4 [shape = 's32[1]{0}', space=sflag, size = 0x4, scoped, tag = 'scoped memory for tpu_custom_call.1']
    #allocation5 [shape = 'u8[65536]{0}', space=vmem, size = 0x10000, scoped, tag = 'input window, operand 1, single buffered']
    #allocation6 [shape = 's32[1]{0}', space=sflag, size = 0x4, scoped, tag = 'scoped memory for tpu_custom_call.1']
    #allocation7 [shape = 'u8[65536]{0}', space=vmem, size = 0x10000, scoped, tag = 'input window, operand 3, single buffered']
    #allocation8 [shape = 'u8[65536]{0}', space=vmem, size = 0x10000, scoped, tag = 'input window, operand 5, single buffered']
    #allocation9 [shape = 's32[1]{0}', space=sflag, size = 0x4, scoped, tag = 'scoped memory for tpu_custom_call.1']
    #allocation10 [shape = 'u8[4096]{0}', space=vmem, size = 0x1000, scoped, tag = 'output window, operand 0, single buffered']
    #allocation11 [shape = 'u8[4096]{0}', space=vmem, size = 0x1000, scoped, tag = 'output window, operand 1, single buffered']
    #allocation12 [shape = 's32[1]{0}', space=sflag, size = 0x4, scoped, tag = 'scoped memory for tpu_custom_call.1']
    %14 = vsyncpa [#allocation3], 0
    %15 = vsyncpa [#allocation6], 0
    %16 = vsyncpa [#allocation9], 0
    %17 = vsyncpa [#allocation4], 0
    %18 = vsyncpa [#allocation12], 0
    // Predicated region
    $region2: #{tpu_custom_call.1} parent=1 // pred_check
      _
    $region3: #{tpu_custom_call.1} parent=1 // pred_check_branch
      %20 = sbr.rel (0) target = $region5
    $region4: #{tpu_custom_call.1} parent=1 // pred_region
      %22 = vsyncadd [#allocation3], 0
      %s24 = sshll.u32 %s0, 4
      %s25 = int_to_ptr.hbm [resolvable:$true] %s24
      %s26 = sshll.u32 [#allocation2], 4
      %s27 = int_to_ptr.vmem [resolvable:$true] %s26
      %29 = dma.hbm_to_vmem [thread:$0]  %s25, 128, %s27, [#allocation3]
    $region5: #{tpu_custom_call.1} parent=1 // pred_fallthru
      _
    // Predicated region
    $region6: #{tpu_custom_call.1} parent=1 // pred_check
      _
    $region7: #{tpu_custom_call.1} parent=1 // pred_check_branch
      %31 = sbr.rel (0) target = $region9
    $region8: #{tpu_custom_call.1} parent=1 // pred_region
      %33 = vsyncadd [#allocation6], 0
      %s34 = sshll.u32 %s1, 4
      %s35 = int_to_ptr.hbm [resolvable:$true] %s34
      %s36 = sshll.u32 [#allocation5], 4
      %s37 = int_to_ptr.vmem [resolvable:$true] %s36
      %42 = dma.hbm_to_vmem [thread:$0]  %s35, 2048, %s37, [#allocation6], 128, 128, 8
    $region9: #{tpu_custom_call.1} parent=1 // pred_fallthru
      _
    // Predicated region
    $region10: #{tpu_custom_call.1} parent=1 // pred_check
      _
    $region11: #{tpu_custom_call.1} parent=1 // pred_check_branch
      %44 = sbr.rel (0) target = $region13
    $region12: #{tpu_custom_call.1} parent=1 // pred_region
      _
    $region13: #{tpu_custom_call.1} parent=1 // pred_fallthru
      _
    // Predicated region
    $region14: #{tpu_custom_call.1} parent=1 // pred_check
      _
    $region15: #{tpu_custom_call.1} parent=1 // pred_check_branch
      %46 = sbr.rel (0) target = $region17
    $region16: #{tpu_custom_call.1} parent=1 // pred_region
      %48 = vsyncadd [#allocation6], 0
      %s49 = sshll.u32 %s3, 4
      %s50 = int_to_ptr.hbm [resolvable:$true] %s49
      %s51 = sshll.u32 [#allocation7], 4
      %s52 = int_to_ptr.vmem [resolvable:$true] %s51
      %57 = dma.hbm_to_vmem [thread:$0]  %s50, 2048, %s52, [#allocation6], 128, 128, 8
    $region17: #{tpu_custom_call.1} parent=1 // pred_fallthru
      _
    // Predicated region
    $region18: #{tpu_custom_call.1} parent=1 // pred_check
      _
    $region19: #{tpu_custom_call.1} parent=1 // pred_check_branch
      %59 = sbr.rel (0) target = $region21
    $region20: #{tpu_custom_call.1} parent=1 // pred_region
      _
    $region21: #{tpu_custom_call.1} parent=1 // pred_fallthru
      _
    // Predicated region
    $region22: #{tpu_custom_call.1} parent=1 // pred_check
      _
    $region23: #{tpu_custom_call.1} parent=1 // pred_check_branch
      %61 = sbr.rel (0) target = $region25
    $region24: #{tpu_custom_call.1} parent=1 // pred_region
      %63 = vsyncadd [#allocation9], 0
      %s64 = sshll.u32 %s5, 4
      %s65 = int_to_ptr.hbm [resolvable:$true] %s64
      %s66 = sshll.u32 [#allocation8], 4
      %s67 = int_to_ptr.vmem [resolvable:$true] %s66
      %72 = dma.hbm_to_vmem [thread:$0]  %s65, 2048, %s67, [#allocation9], 128, 128, 8
    $region25: #{tpu_custom_call.1} parent=1 // pred_fallthru
      _
    // Predicated region
    $region26: #{tpu_custom_call.1} parent=1 // pred_check
      _
    $region27: #{tpu_custom_call.1} parent=1 // pred_check_branch
      %74 = sbr.rel (0) target = $region29
    $region28: #{tpu_custom_call.1} parent=1 // pred_region
      _
    $region29: #{tpu_custom_call.1} parent=1 // pred_fallthru
      _
    // Predicated region
    $region30: #{tpu_custom_call.1} parent=1 // pred_check
      _
    $region31: #{tpu_custom_call.1} parent=1 // pred_check_branch
      %76 = sbr.rel (0) target = $region33
    $region32: #{tpu_custom_call.1} parent=1 // pred_region
      %78 = dma.done [#allocation3], 128
    $region33: #{tpu_custom_call.1} parent=1 // pred_fallthru
      _
    // Predicated region
    $region34: #{tpu_custom_call.1} parent=1 // pred_check
      _
    $region35: #{tpu_custom_call.1} parent=1 // pred_check_branch
      %80 = sbr.rel (0) target = $region37
    $region36: #{tpu_custom_call.1} parent=1 // pred_region
      %82 = dma.done [#allocation6], 2048
    $region37: #{tpu_custom_call.1} parent=1 // pred_fallthru
      _
    // Predicated region
    $region38: #{tpu_custom_call.1} parent=1 // pred_check
      _
    $region39: #{tpu_custom_call.1} parent=1 // pred_check_branch
      %84 = sbr.rel (0) target = $region41
    $region40: #{tpu_custom_call.1} parent=1 // pred_region
      %86 = dma.done [#allocation6], 2048
    $region41: #{tpu_custom_call.1} parent=1 // pred_fallthru
      _
    // Predicated region
    $region42: #{tpu_custom_call.1} parent=1 // pred_check
      _
    $region43: #{tpu_custom_call.1} parent=1 // pred_check_branch
      %88 = sbr.rel (0) target = $region45
    $region44: #{tpu_custom_call.1} parent=1 // pred_region
      %90 = dma.done [#allocation9], 2048
    $region45: #{tpu_custom_call.1} parent=1 // pred_fallthru
      _
    %v91 = vld [vmem:[#allocation2] sm:$0xff]
    %v92 = vld [vmem:[#allocation5] sm:$0xff]
    %v93 = vld [vmem:[#allocation5 + $0x8] sm:$0xff]
    %v94 = vld [vmem:[#allocation5 + $0x10] sm:$0xff]
    %v95 = vld [vmem:[#allocation5 + $0x18] sm:$0xff]
    %v96 = vld [vmem:[#allocation5 + $0x20] sm:$0xff]
    %v97 = vld [vmem:[#allocation5 + $0x28] sm:$0xff]
    %v98 = vld [vmem:[#allocation5 + $0x30] sm:$0xff]
    %v99 = vld [vmem:[#allocation5 + $0x38] sm:$0xff]
    %v100 = vld [vmem:[#allocation5 + $0x40] sm:$0xff]
    %v101 = vld [vmem:[#allocation5 + $0x48] sm:$0xff]
    %v102 = vld [vmem:[#allocation5 + $0x50] sm:$0xff]
    %v103 = vld [vmem:[#allocation5 + $0x58] sm:$0xff]
    %v104 = vld [vmem:[#allocation5 + $0x60] sm:$0xff]
    %v105 = vld [vmem:[#allocation5 + $0x68] sm:$0xff]
    %v106 = vld [vmem:[#allocation5 + $0x70] sm:$0xff]
    %v107 = vld [vmem:[#allocation5 + $0x78] sm:$0xff]
    %v108 = vld [vmem:[%s2] sm:$0x1]
    %v110 = vperm.slane %v108, 0
    %112 = vmatpush.msra.mxu0 %v107
    %113 = vmatpush.msra.mxu0 %v106
    %114 = vmatpush.msra.mxu0 %v105
    %115 = vmatpush.msra.mxu0 %v104
    %116 = vmatpush.msra.mxu0 %v103
    %117 = vmatpush.msra.mxu0 %v102
    %118 = vmatpush.msra.mxu0 %v101
    %119 = vmatpush.msra.mxu0 %v100
    %120 = vmatpush.msra.mxu0 %v99
    %121 = vmatpush.msra.mxu0 %v98
    %122 = vmatpush.msra.mxu0 %v97
    %123 = vmatpush.msra.mxu0 %v96
    %124 = vmatpush.msra.mxu0 %v95
    %125 = vmatpush.msra.mxu0 %v94
    %126 = vmatpush.msra.mxu0 %v93
    %127 = vmatpush.msra.mxu0 %v92
    %128 = vmatmul.f32.gmra.mxu0 %v91
    %v129 = vpop.f32.mrf.mxu0
    %v130 = vadd.f32 %v110, %v129
    %131 = vdwg.mxu0
    %v132 = vmax.f32 %v130, 0.0
    %v133 = vld [vmem:[#allocation7] sm:$0xff]
    %v134 = vld [vmem:[#allocation7 + $0x8] sm:$0xff]
    %v135 = vld [vmem:[#allocation7 + $0x10] sm:$0xff]
    %v136 = vld [vmem:[#allocation7 + $0x18] sm:$0xff]
    %v137 = vld [vmem:[#allocation7 + $0x20] sm:$0xff]
    %v138 = vld [vmem:[#allocation7 + $0x28] sm:$0xff]
    %v139 = vld [vmem:[#allocation7 + $0x30] sm:$0xff]
    %v140 = vld [vmem:[#allocation7 + $0x38] sm:$0xff]
    %v141 = vld [vmem:[#allocation7 + $0x40] sm:$0xff]
    %v142 = vld [vmem:[#allocation7 + $0x48] sm:$0xff]
    %v143 = vld [vmem:[#allocation7 + $0x50] sm:$0xff]
    %v144 = vld [vmem:[#allocation7 + $0x58] sm:$0xff]
    %v145 = vld [vmem:[#allocation7 + $0x60] sm:$0xff]
    %v146 = vld [vmem:[#allocation7 + $0x68] sm:$0xff]
    %v147 = vld [vmem:[#allocation7 + $0x70] sm:$0xff]
    %v148 = vld [vmem:[#allocation7 + $0x78] sm:$0xff]
    %v149 = vld [vmem:[%s4] sm:$0x1]
    %v151 = vperm.slane %v149, 0
    %153 = vmatpush.msra.mxu0 %v148
    %154 = vmatpush.msra.mxu0 %v147
    %155 = vmatpush.msra.mxu0 %v146
    %156 = vmatpush.msra.mxu0 %v145
    %157 = vmatpush.msra.mxu0 %v144
    %158 = vmatpush.msra.mxu0 %v143
    %159 = vmatpush.msra.mxu0 %v142
    %160 = vmatpush.msra.mxu0 %v141
    %161 = vmatpush.msra.mxu0 %v140
    %162 = vmatpush.msra.mxu0 %v139
    %163 = vmatpush.msra.mxu0 %v138
    %164 = vmatpush.msra.mxu0 %v137
    %165 = vmatpush.msra.mxu0 %v136
    %166 = vmatpush.msra.mxu0 %v135
    %167 = vmatpush.msra.mxu0 %v134
    %168 = vmatpush.msra.mxu0 %v133
    %169 = vmatmul.f32.gmra.mxu0 %v132
    %v170 = vpop.f32.mrf.mxu0
    %v171 = vadd.f32 %v151, %v170
    %172 = vdwg.mxu0
    %v173 = vmax.f32 %v171, 0.0
    %v174 = vld [vmem:[#allocation8] sm:$0xff]
    %v175 = vld [vmem:[#allocation8 + $0x8] sm:$0xff]
    %v176 = vld [vmem:[#allocation8 + $0x10] sm:$0xff]
    %v177 = vld [vmem:[#allocation8 + $0x18] sm:$0xff]
    %v178 = vld [vmem:[#allocation8 + $0x20] sm:$0xff]
    %v179 = vld [vmem:[#allocation8 + $0x28] sm:$0xff]
    %v180 = vld [vmem:[#allocation8 + $0x30] sm:$0xff]
    %v181 = vld [vmem:[#allocation8 + $0x38] sm:$0xff]
    %v182 = vld [vmem:[#allocation8 + $0x40] sm:$0xff]
    %v183 = vld [vmem:[#allocation8 + $0x48] sm:$0xff]
    %v184 = vld [vmem:[#allocation8 + $0x50] sm:$0xff]
    %v185 = vld [vmem:[#allocation8 + $0x58] sm:$0xff]
    %v186 = vld [vmem:[#allocation8 + $0x60] sm:$0xff]
    %v187 = vld [vmem:[#allocation8 + $0x68] sm:$0xff]
    %v188 = vld [vmem:[#allocation8 + $0x70] sm:$0xff]
    %v189 = vld [vmem:[#allocation8 + $0x78] sm:$0xff]
    %v190 = vld [vmem:[%s6] sm:$0x1]
    %v192 = vperm.slane %v190, 0
    %194 = vmatpush.msra.mxu0 %v189
    %195 = vmatpush.msra.mxu0 %v188
    %196 = vmatpush.msra.mxu0 %v187
    %197 = vmatpush.msra.mxu0 %v186
    %198 = vmatpush.msra.mxu0 %v185
    %199 = vmatpush.msra.mxu0 %v184
    %200 = vmatpush.msra.mxu0 %v183
    %201 = vmatpush.msra.mxu0 %v182
    %202 = vmatpush.msra.mxu0 %v181
    %203 = vmatpush.msra.mxu0 %v180
    %204 = vmatpush.msra.mxu0 %v179
    %205 = vmatpush.msra.mxu0 %v178
    %206 = vmatpush.msra.mxu0 %v177
    %207 = vmatpush.msra.mxu0 %v176
    %208 = vmatpush.msra.mxu0 %v175
    %209 = vmatpush.msra.mxu0 %v174
    %210 = vmatmul.f32.gmra.mxu0 %v173
    %v211 = vpop.f32.mrf.mxu0
    %v212 = vadd.f32 %v192, %v211
    %213 = vdwg.mxu0
    %214 = vst [vmem:[#allocation10] sm:$0xff] %v212
    %v215 = vlaneseq
    %v216 = vand.u32 %v215, 127
    %vm217 = vcmp.lt.s32.totalorder %v216, 4
    %v218 = vsel %vm217, %v212, -1e+30
    %219 = vmax.xlane.f32.xlu0 %v218
    %v220 = vpop.xlane.xlu0 %219
    %v221 = vsub.f32 %v218, %v220
    %v222 = vmul.f32 %v221, 1.442695
    %v223 = vpow.pop %v222
    %224 = vadd.xlane.f32.xlu0 %v223
    %v225 = vpop.xlane.xlu0 %224
    %v226 = vrcp.pop %v225
    %v227 = vmul.f32 %v223, %v226
    %228 = vst [vmem:[#allocation11] sm:$0xff] %v227
    // Predicated region
    $region46: #{tpu_custom_call.1} parent=1 // pred_check
      _
    $region47: #{tpu_custom_call.1} parent=1 // pred_check_branch
      %230 = sbr.rel (0) target = $region49
    $region48: #{tpu_custom_call.1} parent=1 // pred_region
      %232 = vsyncadd [#allocation4], 0
      %s234 = sshll.u32 [#allocation10], 4
      %s235 = int_to_ptr.vmem [resolvable:$true] %s234
      %s236 = sshll.u32 %s7, 4
      %s237 = int_to_ptr.hbm [resolvable:$true] %s236
      %239 = dma.vmem_to_hbm [thread:$0]  %s235, 128, %s237, [#allocation4]
    $region49: #{tpu_custom_call.1} parent=1 // pred_fallthru
      _
    // Predicated region
    $region50: #{tpu_custom_call.1} parent=1 // pred_check
      _
    $region51: #{tpu_custom_call.1} parent=1 // pred_check_branch
      %241 = sbr.rel (0) target = $region53
    $region52: #{tpu_custom_call.1} parent=1 // pred_region
      %243 = vsyncadd [#allocation12], 0
      %s245 = sshll.u32 [#allocation11], 4
      %s246 = int_to_ptr.vmem [resolvable:$true] %s245
      %s247 = sshll.u32 %s8, 4
      %s248 = int_to_ptr.hbm [resolvable:$true] %s247
      %250 = dma.vmem_to_hbm [thread:$0]  %s246, 128, %s248, [#allocation12]
    $region53: #{tpu_custom_call.1} parent=1 // pred_fallthru
      _
    // Predicated region
    $region54: #{tpu_custom_call.1} parent=1 // pred_check
      _
    $region55: #{tpu_custom_call.1} parent=1 // pred_check_branch
      %252 = sbr.rel (0) target = $region57
    $region56: #{tpu_custom_call.1} parent=1 // pred_region
      %254 = dma.done [#allocation4], 128
    $region57: #{tpu_custom_call.1} parent=1 // pred_fallthru
      _
    // Predicated region
    $region58: #{tpu_custom_call.1} parent=1 // pred_check
      _
    $region59: #{tpu_custom_call.1} parent=1 // pred_check_branch
      %256 = sbr.rel (0) target = $region61
    $region60: #{tpu_custom_call.1} parent=1 // pred_region
      %258 = dma.done [#allocation12], 128
    $region61: #{tpu_custom_call.1} parent=1 // pred_fallthru
      _
    %259 = vsyncpa [#allocation3], 1
    %260 = vsyncpa [#allocation6], 1
    %261 = vsyncpa [#allocation9], 1
    %262 = vsyncpa [#allocation4], 1
    %263 = vsyncpa [#allocation12], 1

</llo_original>
